<compile_context>
chip_gen: v7x
topology: tpu7x:2x2x1
jax: 0.10.0
libtpu: 0.0.40
codegen_flags: <defaults>
</compile_context>

<pallas_src>
import functools
import math

import jax
import jax.numpy as jnp
from jax import lax
from jax.experimental import pallas as pl
from jax.experimental.pallas import tpu as pltpu


def _garchlstm_kernel(coef_ref,       # SMEM (4,): omega, alpha, beta, gamma (already reparameterized)
                      x_ref,          # VMEM (TQ, B, 1): time block of inputs
                      wx_ref,         # VMEM (3, 1, H): x-input rows of [Wf, Wi, Wc]
                      wh_ref,         # VMEM (3, 1, H): hidden-sig2 rows of [Wf, Wi, Wc]
                      b_ref,          # VMEM (3, 1, H): [bf, bi, bc]
                      wo_ref,         # VMEM (1, H): readout weights (row layout)
                      out_ref,        # VMEM (B, 1): final hidden_sig2
                      sig2_prev_ref,  # scratch VMEM (B, 1)  GARCH recursion state
                      h_sig2_ref,     # scratch VMEM (B, 1)  LSTM "sigma^2" hidden
                      h_mem_ref,      # scratch VMEM (B, H)  LSTM memory cell
                      *, seq_len, tq, unroll):
    blk = pl.program_id(0)
    B, H = h_mem_ref.shape

    # --- init recurrent state on the first time block ---
    @pl.when(blk == 0)
    def _():
        sig2_prev_ref[...] = jnp.zeros_like(sig2_prev_ref)
        h_sig2_ref[...] = jnp.zeros_like(h_sig2_ref)
        h_mem_ref[...] = jnp.zeros_like(h_mem_ref)

    # --- GARCH coefficients (precomputed in the wrapper; cheap SMEM scalar reads) ---
    omega = coef_ref[0]
    alpha = coef_ref[1]
    beta = coef_ref[2]
    gamma = coef_ref[3]

    # --- hoist weight loads / broadcasts out of the recurrence loop ---
    wxb = jnp.broadcast_to(wx_ref[...], (3, B, H))
    whb = jnp.broadcast_to(wh_ref[...], (3, B, H))
    bb = jnp.broadcast_to(b_ref[...], (3, B, H))
    wo_row = wo_ref[...]                                   # (1, H)

    t0 = blk * tq
    needs_mask = (seq_len % tq) != 0                       # static Python bool

    def step(i, carry):
        sig2_prev, h_sig2, h_mem = carry
        x_t = x_ref[i]                                     # (B, 1)

        # Fused gate pre-activations [F | i | c~] as one (3, B, H) slab (rank-1 updates:
        # conc @ W == x_t * W_row0 + h_sig2 * W_row1).
        pre = x_t[None] * wxb + h_sig2[None] * whb + bb
        gate_f = jax.nn.sigmoid(pre[0])
        gate_i = jax.nn.sigmoid(pre[1])
        c_sq = jnp.tanh(pre[2])

        # GJR-GARCH update (mean model == 0, so resids == x_t).
        neg_ind = (x_t < 0.0).astype(jnp.float32)
        sig2_t = omega + x_t * x_t * (alpha + gamma * neg_ind) + sig2_prev * beta

        # LSTM-style memory + sigma^2 hidden update; readout via VPU mul + lane reduce.
        h_mem_new = gate_f * h_mem + gate_i * c_sq
        proj = jnp.sum(jnp.tanh(h_mem_new) * wo_row, axis=-1, keepdims=True)   # (B, 1)
        h_sig2_new = sig2_t * (1.0 + proj)

        if needs_mask:
            # Only the (padded) last block contains invalid steps; freeze state there.
            valid = (t0 + i) < seq_len
            sig2_t = jnp.where(valid, sig2_t, sig2_prev)
            h_sig2_new = jnp.where(valid, h_sig2_new, h_sig2)
            h_mem_new = jnp.where(valid, h_mem_new, h_mem)
        return sig2_t, h_sig2_new, h_mem_new

    carry0 = (sig2_prev_ref[...], h_sig2_ref[...], h_mem_ref[...])
    sig2_prev, h_sig2, h_mem = lax.fori_loop(0, tq, step, carry0, unroll=unroll)

    sig2_prev_ref[...] = sig2_prev
    h_sig2_ref[...] = h_sig2
    h_mem_ref[...] = h_mem

    # Output is resident (constant out index_map); only the last block needs to store.
    @pl.when(blk == pl.num_programs(0) - 1)
    def _():
        out_ref[...] = h_sig2


def garchlstm_forward(x, raw_params, Wf, bf, Wi, bi, Wc, bc, wo, *, tq=256, unroll=8):
    """x: (B, S) float32. Returns final hidden_sig2 of shape (B, 1)."""
    B, S = x.shape
    H = Wf.shape[1]

    # --- hoist GARCH reparameterization out of the kernel (same formulas as the module) ---
    omega = jax.nn.softplus(raw_params[0]) / 100.0
    a_un = jnp.exp(raw_params[1])
    b_un = jnp.exp(raw_params[2])
    g_un = jnp.exp(raw_params[3])
    ssum = 1.0 + a_un + b_un + g_un / 2.0
    coefs = jnp.stack([omega, a_un / ssum, b_un / ssum, g_un / ssum]).astype(jnp.float32)

    # --- fuse the three gate Linear layers into stacked (3, 1, H) slabs ---
    wx3 = jnp.stack([Wf[0], Wi[0], Wc[0]], axis=0).reshape(3, 1, H)   # x-input rows
    wh3 = jnp.stack([Wf[1], Wi[1], Wc[1]], axis=0).reshape(3, 1, H)   # hidden rows
    b3 = jnp.stack([bf, bi, bc], axis=0).reshape(3, 1, H)             # biases
    wo_row = wo.reshape(1, H)                                         # readout as a row

    # --- time-major layout, blocked time axis (pad S to a multiple of tq) ---
    tq = max(1, min(tq, S))
    num_blocks = pl.cdiv(S, tq)
    s_pad = num_blocks * tq
    x_tm = jnp.transpose(x, (1, 0)).reshape(S, B, 1)
    if s_pad != S:
        x_tm = jnp.pad(x_tm, ((0, s_pad - S), (0, 0), (0, 0)))

    kernel = functools.partial(_garchlstm_kernel, seq_len=S, tq=tq,
                               unroll=min(unroll, tq))

    grid_spec = pltpu.PrefetchScalarGridSpec(
        num_scalar_prefetch=0,
        grid=(num_blocks,),
        in_specs=[
            pl.BlockSpec(memory_space=pltpu.MemorySpace.SMEM),        # GARCH coefs (4,)
            pl.BlockSpec((tq, B, 1), lambda t: (t, 0, 0)),            # x time block
            pl.BlockSpec((3, 1, H), lambda t: (0, 0, 0)),             # fused x-rows
            pl.BlockSpec((3, 1, H), lambda t: (0, 0, 0)),             # fused h-rows
            pl.BlockSpec((3, 1, H), lambda t: (0, 0, 0)),             # fused biases
            pl.BlockSpec((1, H), lambda t: (0, 0)),                   # readout row
        ],
        out_specs=pl.BlockSpec((B, 1), lambda t: (0, 0)),
        scratch_shapes=[
            pltpu.VMEM((B, 1), jnp.float32),   # sig2_prev
            pltpu.VMEM((B, 1), jnp.float32),   # hidden_sig2
            pltpu.VMEM((B, H), jnp.float32),   # hidden_memory
        ],
    )

    return pl.pallas_call(
        kernel,
        out_shape=jax.ShapeDtypeStruct((B, 1), jnp.float32),
        grid_spec=grid_spec,
        compiler_params=pltpu.CompilerParams(
            dimension_semantics=("arbitrary",)),   # recurrent time axis -> sequential
    )(coefs, x_tm, wx3, wh3, b3, wo_row)


def garchlstm_reference(x, raw_params, Wf, bf, Wi, bi, Wc, bc, wo):
    """Pure-JAX reference mirroring the PyTorch forward exactly."""
    B, S = x.shape
    H = Wf.shape[1]
    omega = jax.nn.softplus(raw_params[0]) / 100.0
    a_un = jnp.exp(raw_params[1])
    b_un = jnp.exp(raw_params[2])
    g_un = jnp.exp(raw_params[3])
    ssum = 1.0 + a_un + b_un + g_un / 2.0
    alpha, beta, gamma = a_un / ssum, b_un / ssum, g_un / ssum

    h_sig2 = jnp.zeros((B, 1), jnp.float32)
    h_mem = jnp.zeros((B, H), jnp.float32)
    sig2_prev = jnp.zeros((B, 1), jnp.float32)
    for t in range(S):
        x_t = x[:, t:t + 1]
        conc = jnp.concatenate([x_t, h_sig2], axis=1)
        F = jax.nn.sigmoid(conc @ Wf + bf)
        i = jax.nn.sigmoid(conc @ Wi + bi)
        c = jnp.tanh(conc @ Wc + bc)
        neg_ind = (x_t < 0.0).astype(jnp.float32)
        sig2_t = omega + x_t * x_t * (alpha + gamma * neg_ind) + sig2_prev * beta
        sig2_prev = sig2_t
        h_mem = F * h_mem + i * c
        h_sig2 = sig2_t * (1.0 + jnp.tanh(h_mem) @ wo)
    return h_sig2


if __name__ == "__main__":
    B, S, H = 2, 8, 32

    key = jax.random.PRNGKey(0)
    ks = jax.random.split(key, 8)

    # Deterministic parameter init (shapes match the nn.Linear layers in the module).
    bound_g = 1.0 / math.sqrt(2.0)   # Linear(2, H)
    Wf = jax.random.uniform(ks[0], (2, H), jnp.float32, -bound_g, bound_g)
    bf = jax.random.uniform(ks[1], (1, H), jnp.float32, -bound_g, bound_g)
    Wi = jax.random.uniform(ks[2], (2, H), jnp.float32, -bound_g, bound_g)
    bi = jax.random.uniform(ks[3], (1, H), jnp.float32, -bound_g, bound_g)
    Wc = jax.random.uniform(ks[4], (2, H), jnp.float32, -bound_g, bound_g)
    bc = jax.random.uniform(ks[5], (1, H), jnp.float32, -bound_g, bound_g)
    bound_w = 1.0 / math.sqrt(H)     # Linear(H, 1, bias=False)
    wo = jax.random.uniform(ks[6], (H, 1), jnp.float32, -bound_w, bound_w)

    # raw GARCH params exactly as in __init__: omega=0.0, alpha=0.1, beta=0.8, gamma=0.5
    raw_params = jnp.array([0.0, 0.1, 0.8, 0.5], dtype=jnp.float32)

    # Example input: (batch, seq) of small "returns"
    x = 0.1 * jax.random.normal(ks[7], (B, S), jnp.float32)

    ref = garchlstm_reference(x, raw_params, Wf, bf, Wi, bi, Wc, bc, wo)

    # Default path: tq clamps to S -> single grid step, fully unrolled inner loop.
    out = garchlstm_forward(x, raw_params, Wf, bf, Wi, bi, Wc, bc, wo)
    out = jax.block_until_ready(out)
    assert out.shape == (B, 1)
    assert jnp.allclose(out, ref, atol=1e-5, rtol=1e-5), (out, ref)

    # Also exercise the multi-block time-tiling + remainder-masking path (S=8, tq=3).
    out_blk = garchlstm_forward(x, raw_params, Wf, bf, Wi, bi, Wc, bc, wo, tq=3)
    out_blk = jax.block_until_ready(out_blk)
    assert jnp.allclose(out_blk, ref, atol=1e-5, rtol=1e-5), (out_blk, ref)

    print("KERNEL_OK")
</pallas_src>

<mosaic_0001>
module attributes {stable_mosaic.version = 11 : i64} {
  func.func @_garchlstm_kernel(%arg0: i32, %arg1: memref<4xf32, #tpu.memory_space<smem>>, %arg2: memref<8x2x1xf32, #tpu.memory_space<vmem>>, %arg3: memref<3x1x32xf32, #tpu.memory_space<vmem>>, %arg4: memref<3x1x32xf32, #tpu.memory_space<vmem>>, %arg5: memref<3x1x32xf32, #tpu.memory_space<vmem>>, %arg6: memref<1x32xf32, #tpu.memory_space<vmem>>, %arg7: memref<2x1xf32, #tpu.memory_space<vmem>>, %arg8: memref<2x1xf32, #tpu.memory_space<vmem>>, %arg9: memref<2x1xf32, #tpu.memory_space<vmem>>, %arg10: memref<2x32xf32, #tpu.memory_space<vmem>>) attributes {dimension_semantics = [#tpu.dimension_semantics<arbitrary>], iteration_bounds = array<i64: 1>, scalar_prefetch = 0 : i64, scratch_operands = 3 : i64, tpu.core_type = #tpu.core_type<tc>, window_params = [{transform_indices = @transform_0, window_bounds = array<i64: 4>}, {transform_indices = @transform_1, window_bounds = array<i64: 8, 2, 1>}, {pipeline_mode = #tpu.pipeline_mode<synchronous>, transform_indices = @transform_2, window_bounds = array<i64: 3, 1, 32>}, {pipeline_mode = #tpu.pipeline_mode<synchronous>, transform_indices = @transform_3, window_bounds = array<i64: 3, 1, 32>}, {pipeline_mode = #tpu.pipeline_mode<synchronous>, transform_indices = @transform_4, window_bounds = array<i64: 3, 1, 32>}, {pipeline_mode = #tpu.pipeline_mode<synchronous>, transform_indices = @transform_5, window_bounds = array<i64: 1, 32>}, {pipeline_mode = #tpu.pipeline_mode<synchronous>, transform_indices = @transform_6, window_bounds = array<i64: 2, 1>}]} {
    %c0_i32 = arith.constant 0 : i32
    %0 = arith.cmpi eq, %arg0, %c0_i32 : i32
    %1 = arith.extui %0 : i1 to i32
    %c0_i32_0 = arith.constant 0 : i32
    %2 = arith.cmpi ne, %1, %c0_i32_0 : i32
    scf.if %2 {
      %cst_82 = arith.constant 0.000000e+00 : f32
      %458 = vector.broadcast %cst_82 : f32 to vector<2x1xf32>
      %c0_83 = arith.constant 0 : index
      %c0_84 = arith.constant 0 : index
      %459 = vector.load %arg8[%c0_83, %c0_84] : memref<2x1xf32, #tpu.memory_space<vmem>>, vector<2x1xf32>
      tpu.vector_store %arg8[%c0_83, %c0_84], %458 {strides = array<i32>} : memref<2x1xf32, #tpu.memory_space<vmem>>, vector<2x1xf32>,
      %cst_85 = arith.constant 0.000000e+00 : f32
      %460 = vector.broadcast %cst_85 : f32 to vector<2x1xf32>
      %c0_86 = arith.constant 0 : index
      %c0_87 = arith.constant 0 : index
      %461 = vector.load %arg9[%c0_86, %c0_87] : memref<2x1xf32, #tpu.memory_space<vmem>>, vector<2x1xf32>
      tpu.vector_store %arg9[%c0_86, %c0_87], %460 {strides = array<i32>} : memref<2x1xf32, #tpu.memory_space<vmem>>, vector<2x1xf32>,
      %cst_88 = arith.constant 0.000000e+00 : f32
      %462 = vector.broadcast %cst_88 : f32 to vector<2x32xf32>
      %c0_89 = arith.constant 0 : index
      %c0_90 = arith.constant 0 : index
      %463 = vector.load %arg10[%c0_89, %c0_90] : memref<2x32xf32, #tpu.memory_space<vmem>>, vector<2x32xf32>
      tpu.vector_store %arg10[%c0_89, %c0_90], %462 {strides = array<i32>} : memref<2x32xf32, #tpu.memory_space<vmem>>, vector<2x32xf32>,
    } else {
    }
    %c0 = arith.constant 0 : index
    %3 = memref.load %arg1[%c0] : memref<4xf32, #tpu.memory_space<smem>>
    %c1 = arith.constant 1 : index
    %4 = memref.load %arg1[%c1] : memref<4xf32, #tpu.memory_space<smem>>
    %c2 = arith.constant 2 : index
    %5 = memref.load %arg1[%c2] : memref<4xf32, #tpu.memory_space<smem>>
    %c3 = arith.constant 3 : index
    %6 = memref.load %arg1[%c3] : memref<4xf32, #tpu.memory_space<smem>>
    %c0_1 = arith.constant 0 : index
    %c0_2 = arith.constant 0 : index
    %c0_3 = arith.constant 0 : index
    %7 = vector.load %arg3[%c0_1, %c0_2, %c0_3] : memref<3x1x32xf32, #tpu.memory_space<vmem>>, vector<3x1x32xf32>
    %8 = vector.shape_cast %7 : vector<3x1x32xf32> to vector<3x1x32xf32>
    %9 = vector.broadcast %8 : vector<3x1x32xf32> to vector<3x2x32xf32>
    %c0_4 = arith.constant 0 : index
    %c0_5 = arith.constant 0 : index
    %c0_6 = arith.constant 0 : index
    %10 = vector.load %arg4[%c0_4, %c0_5, %c0_6] : memref<3x1x32xf32, #tpu.memory_space<vmem>>, vector<3x1x32xf32>
    %11 = vector.shape_cast %10 : vector<3x1x32xf32> to vector<3x1x32xf32>
    %12 = vector.broadcast %11 : vector<3x1x32xf32> to vector<3x2x32xf32>
    %c0_7 = arith.constant 0 : index
    %c0_8 = arith.constant 0 : index
    %c0_9 = arith.constant 0 : index
    %13 = vector.load %arg5[%c0_7, %c0_8, %c0_9] : memref<3x1x32xf32, #tpu.memory_space<vmem>>, vector<3x1x32xf32>
    %14 = vector.shape_cast %13 : vector<3x1x32xf32> to vector<3x1x32xf32>
    %15 = vector.broadcast %14 : vector<3x1x32xf32> to vector<3x2x32xf32>
    %c0_10 = arith.constant 0 : index
    %c0_11 = arith.constant 0 : index
    %16 = vector.load %arg6[%c0_10, %c0_11] : memref<1x32xf32, #tpu.memory_space<vmem>>, vector<1x32xf32>
    %c0_12 = arith.constant 0 : index
    %c0_13 = arith.constant 0 : index
    %17 = vector.load %arg8[%c0_12, %c0_13] : memref<2x1xf32, #tpu.memory_space<vmem>>, vector<2x1xf32>
    %c0_14 = arith.constant 0 : index
    %c0_15 = arith.constant 0 : index
    %18 = vector.load %arg9[%c0_14, %c0_15] : memref<2x1xf32, #tpu.memory_space<vmem>>, vector<2x1xf32>
    %c0_16 = arith.constant 0 : index
    %c0_17 = arith.constant 0 : index
    %19 = vector.load %arg10[%c0_16, %c0_17] : memref<2x32xf32, #tpu.memory_space<vmem>>, vector<2x32xf32>
    %c0_i32_18 = arith.constant 0 : i32
    %20 = arith.index_cast %c0_i32_18 : i32 to index
    %c0_19 = arith.constant 0 : index
    %c0_20 = arith.constant 0 : index
    %21 = vector.load %arg2[%20, %c0_19, %c0_20] : memref<8x2x1xf32, #tpu.memory_space<vmem>>, vector<1x2x1xf32>
    %22 = vector.shape_cast %21 : vector<1x2x1xf32> to vector<2x1xf32>
    %23 = vector.shape_cast %22 : vector<2x1xf32> to vector<1x2x1xf32>
    %24 = vector.broadcast %23 : vector<1x2x1xf32> to vector<3x2x32xf32>
    %25 = arith.mulf %24, %9 : vector<3x2x32xf32>
    %26 = vector.shape_cast %18 : vector<2x1xf32> to vector<1x2x1xf32>
    %27 = vector.broadcast %26 : vector<1x2x1xf32> to vector<3x2x32xf32>
    %28 = arith.mulf %27, %12 : vector<3x2x32xf32>
    %29 = arith.addf %25, %28 : vector<3x2x32xf32>
    %30 = arith.addf %29, %15 : vector<3x2x32xf32>
    %31 = vector.extract_strided_slice %30 {offsets = [0, 0, 0], sizes = [1, 2, 32], strides = [1, 1, 1]} : vector<3x2x32xf32> to vector<1x2x32xf32>
    %32 = vector.shape_cast %31 : vector<1x2x32xf32> to vector<2x32xf32>
    %33 = arith.negf %32 : vector<2x32xf32>
    %34 = math.exp %33 : vector<2x32xf32>
    %cst = arith.constant 1.000000e+00 : f32
    %35 = vector.broadcast %cst : f32 to vector<2x32xf32>
    %36 = arith.addf %35, %34 : vector<2x32xf32>
    %37 = arith.divf %35, %36 : vector<2x32xf32>
    %38 = vector.extract_strided_slice %30 {offsets = [1, 0, 0], sizes = [1, 2, 32], strides = [1, 1, 1]} : vector<3x2x32xf32> to vector<1x2x32xf32>
    %39 = vector.shape_cast %38 : vector<1x2x32xf32> to vector<2x32xf32>
    %40 = arith.negf %39 : vector<2x32xf32>
    %41 = math.exp %40 : vector<2x32xf32>
    %cst_21 = arith.constant 1.000000e+00 : f32
    %42 = vector.broadcast %cst_21 : f32 to vector<2x32xf32>
    %43 = arith.addf %42, %41 : vector<2x32xf32>
    %44 = arith.divf %42, %43 : vector<2x32xf32>
    %45 = vector.extract_strided_slice %30 {offsets = [2, 0, 0], sizes = [1, 2, 32], strides = [1, 1, 1]} : vector<3x2x32xf32> to vector<1x2x32xf32>
    %46 = vector.shape_cast %45 : vector<1x2x32xf32> to vector<2x32xf32>
    %47 = math.tanh %46 : vector<2x32xf32>
    %cst_22 = arith.constant 0.000000e+00 : f32
    %48 = vector.broadcast %cst_22 : f32 to vector<2x1xf32>
    %49 = arith.cmpf olt, %22, %48 : vector<2x1xf32>
    %50 = arith.extui %49 : vector<2x1xi1> to vector<2x1xi32>
    %51 = arith.sitofp %50 : vector<2x1xi32> to vector<2x1xf32>
    %52 = arith.mulf %22, %22 : vector<2x1xf32>
    %53 = vector.broadcast %6 : f32 to vector<2x1xf32>
    %54 = arith.mulf %53, %51 : vector<2x1xf32>
    %55 = vector.broadcast %4 : f32 to vector<2x1xf32>
    %56 = arith.addf %55, %54 : vector<2x1xf32>
    %57 = arith.mulf %52, %56 : vector<2x1xf32>
    %58 = vector.broadcast %3 : f32 to vector<2x1xf32>
    %59 = arith.addf %58, %57 : vector<2x1xf32>
    %60 = vector.broadcast %5 : f32 to vector<2x1xf32>
    %61 = arith.mulf %17, %60 : vector<2x1xf32>
    %62 = arith.addf %59, %61 : vector<2x1xf32>
    %63 = arith.mulf %37, %19 : vector<2x32xf32>
    %64 = arith.mulf %44, %47 : vector<2x32xf32>
    %65 = arith.addf %63, %64 : vector<2x32xf32>
    %66 = math.tanh %65 : vector<2x32xf32>
    %67 = vector.broadcast %16 : vector<1x32xf32> to vector<2x32xf32>
    %68 = arith.mulf %66, %67 : vector<2x32xf32>
    %cst_23 = arith.constant dense<0.000000e+00> : vector<2xf32>
    %69 = vector.multi_reduction <add>, %68, %cst_23 [1] : vector<2x32xf32> to vector<2xf32>
    %70 = vector.shape_cast %69 : vector<2xf32> to vector<2x1xf32>
    %cst_24 = arith.constant 1.000000e+00 : f32
    %71 = vector.broadcast %cst_24 : f32 to vector<2x1xf32>
    %72 = arith.addf %71, %70 : vector<2x1xf32>
    %73 = arith.mulf %62, %72 : vector<2x1xf32>
    %c1_i32 = arith.constant 1 : i32
    %74 = arith.index_cast %c1_i32 : i32 to index
    %c0_25 = arith.constant 0 : index
    %c0_26 = arith.constant 0 : index
    %75 = vector.load %arg2[%74, %c0_25, %c0_26] : memref<8x2x1xf32, #tpu.memory_space<vmem>>, vector<1x2x1xf32>
    %76 = vector.shape_cast %75 : vector<1x2x1xf32> to vector<2x1xf32>
    %77 = vector.shape_cast %76 : vector<2x1xf32> to vector<1x2x1xf32>
    %78 = vector.broadcast %77 : vector<1x2x1xf32> to vector<3x2x32xf32>
    %79 = arith.mulf %78, %9 : vector<3x2x32xf32>
    %80 = vector.shape_cast %73 : vector<2x1xf32> to vector<1x2x1xf32>
    %81 = vector.broadcast %80 : vector<1x2x1xf32> to vector<3x2x32xf32>
    %82 = arith.mulf %81, %12 : vector<3x2x32xf32>
    %83 = arith.addf %79, %82 : vector<3x2x32xf32>
    %84 = arith.addf %83, %15 : vector<3x2x32xf32>
    %85 = vector.extract_strided_slice %84 {offsets = [0, 0, 0], sizes = [1, 2, 32], strides = [1, 1, 1]} : vector<3x2x32xf32> to vector<1x2x32xf32>
    %86 = vector.shape_cast %85 : vector<1x2x32xf32> to vector<2x32xf32>
    %87 = arith.negf %86 : vector<2x32xf32>
    %88 = math.exp %87 : vector<2x32xf32>
    %cst_27 = arith.constant 1.000000e+00 : f32
    %89 = vector.broadcast %cst_27 : f32 to vector<2x32xf32>
    %90 = arith.addf %89, %88 : vector<2x32xf32>
    %91 = arith.divf %89, %90 : vector<2x32xf32>
    %92 = vector.extract_strided_slice %84 {offsets = [1, 0, 0], sizes = [1, 2, 32], strides = [1, 1, 1]} : vector<3x2x32xf32> to vector<1x2x32xf32>
    %93 = vector.shape_cast %92 : vector<1x2x32xf32> to vector<2x32xf32>
    %94 = arith.negf %93 : vector<2x32xf32>
    %95 = math.exp %94 : vector<2x32xf32>
    %cst_28 = arith.constant 1.000000e+00 : f32
    %96 = vector.broadcast %cst_28 : f32 to vector<2x32xf32>
    %97 = arith.addf %96, %95 : vector<2x32xf32>
    %98 = arith.divf %96, %97 : vector<2x32xf32>
    %99 = vector.extract_strided_slice %84 {offsets = [2, 0, 0], sizes = [1, 2, 32], strides = [1, 1, 1]} : vector<3x2x32xf32> to vector<1x2x32xf32>
    %100 = vector.shape_cast %99 : vector<1x2x32xf32> to vector<2x32xf32>
    %101 = math.tanh %100 : vector<2x32xf32>
    %cst_29 = arith.constant 0.000000e+00 : f32
    %102 = vector.broadcast %cst_29 : f32 to vector<2x1xf32>
    %103 = arith.cmpf olt, %76, %102 : vector<2x1xf32>
    %104 = arith.extui %103 : vector<2x1xi1> to vector<2x1xi32>
    %105 = arith.sitofp %104 : vector<2x1xi32> to vector<2x1xf32>
    %106 = arith.mulf %76, %76 : vector<2x1xf32>
    %107 = vector.broadcast %6 : f32 to vector<2x1xf32>
    %108 = arith.mulf %107, %105 : vector<2x1xf32>
    %109 = vector.broadcast %4 : f32 to vector<2x1xf32>
    %110 = arith.addf %109, %108 : vector<2x1xf32>
    %111 = arith.mulf %106, %110 : vector<2x1xf32>
    %112 = vector.broadcast %3 : f32 to vector<2x1xf32>
    %113 = arith.addf %112, %111 : vector<2x1xf32>
    %114 = vector.broadcast %5 : f32 to vector<2x1xf32>
    %115 = arith.mulf %62, %114 : vector<2x1xf32>
    %116 = arith.addf %113, %115 : vector<2x1xf32>
    %117 = arith.mulf %91, %65 : vector<2x32xf32>
    %118 = arith.mulf %98, %101 : vector<2x32xf32>
    %119 = arith.addf %117, %118 : vector<2x32xf32>
    %120 = math.tanh %119 : vector<2x32xf32>
    %121 = vector.broadcast %16 : vector<1x32xf32> to vector<2x32xf32>
    %122 = arith.mulf %120, %121 : vector<2x32xf32>
    %cst_30 = arith.constant dense<0.000000e+00> : vector<2xf32>
    %123 = vector.multi_reduction <add>, %122, %cst_30 [1] : vector<2x32xf32> to vector<2xf32>
    %124 = vector.shape_cast %123 : vector<2xf32> to vector<2x1xf32>
    %cst_31 = arith.constant 1.000000e+00 : f32
    %125 = vector.broadcast %cst_31 : f32 to vector<2x1xf32>
    %126 = arith.addf %125, %124 : vector<2x1xf32>
    %127 = arith.mulf %116, %126 : vector<2x1xf32>
    %c2_i32 = arith.constant 2 : i32
    %128 = arith.index_cast %c2_i32 : i32 to index
    %c0_32 = arith.constant 0 : index
    %c0_33 = arith.constant 0 : index
    %129 = vector.load %arg2[%128, %c0_32, %c0_33] : memref<8x2x1xf32, #tpu.memory_space<vmem>>, vector<1x2x1xf32>
    %130 = vector.shape_cast %129 : vector<1x2x1xf32> to vector<2x1xf32>
    %131 = vector.shape_cast %130 : vector<2x1xf32> to vector<1x2x1xf32>
    %132 = vector.broadcast %131 : vector<1x2x1xf32> to vector<3x2x32xf32>
    %133 = arith.mulf %132, %9 : vector<3x2x32xf32>
    %134 = vector.shape_cast %127 : vector<2x1xf32> to vector<1x2x1xf32>
    %135 = vector.broadcast %134 : vector<1x2x1xf32> to vector<3x2x32xf32>
    %136 = arith.mulf %135, %12 : vector<3x2x32xf32>
    %137 = arith.addf %133, %136 : vector<3x2x32xf32>
    %138 = arith.addf %137, %15 : vector<3x2x32xf32>
    %139 = vector.extract_strided_slice %138 {offsets = [0, 0, 0], sizes = [1, 2, 32], strides = [1, 1, 1]} : vector<3x2x32xf32> to vector<1x2x32xf32>
    %140 = vector.shape_cast %139 : vector<1x2x32xf32> to vector<2x32xf32>
    %141 = arith.negf %140 : vector<2x32xf32>
    %142 = math.exp %141 : vector<2x32xf32>
    %cst_34 = arith.constant 1.000000e+00 : f32
    %143 = vector.broadcast %cst_34 : f32 to vector<2x32xf32>
    %144 = arith.addf %143, %142 : vector<2x32xf32>
    %145 = arith.divf %143, %144 : vector<2x32xf32>
    %146 = vector.extract_strided_slice %138 {offsets = [1, 0, 0], sizes = [1, 2, 32], strides = [1, 1, 1]} : vector<3x2x32xf32> to vector<1x2x32xf32>
    %147 = vector.shape_cast %146 : vector<1x2x32xf32> to vector<2x32xf32>
    %148 = arith.negf %147 : vector<2x32xf32>
    %149 = math.exp %148 : vector<2x32xf32>
    %cst_35 = arith.constant 1.000000e+00 : f32
    %150 = vector.broadcast %cst_35 : f32 to vector<2x32xf32>
    %151 = arith.addf %150, %149 : vector<2x32xf32>
    %152 = arith.divf %150, %151 : vector<2x32xf32>
    %153 = vector.extract_strided_slice %138 {offsets = [2, 0, 0], sizes = [1, 2, 32], strides = [1, 1, 1]} : vector<3x2x32xf32> to vector<1x2x32xf32>
    %154 = vector.shape_cast %153 : vector<1x2x32xf32> to vector<2x32xf32>
    %155 = math.tanh %154 : vector<2x32xf32>
    %cst_36 = arith.constant 0.000000e+00 : f32
    %156 = vector.broadcast %cst_36 : f32 to vector<2x1xf32>
    %157 = arith.cmpf olt, %130, %156 : vector<2x1xf32>
    %158 = arith.extui %157 : vector<2x1xi1> to vector<2x1xi32>
    %159 = arith.sitofp %158 : vector<2x1xi32> to vector<2x1xf32>
    %160 = arith.mulf %130, %130 : vector<2x1xf32>
    %161 = vector.broadcast %6 : f32 to vector<2x1xf32>
    %162 = arith.mulf %161, %159 : vector<2x1xf32>
    %163 = vector.broadcast %4 : f32 to vector<2x1xf32>
    %164 = arith.addf %163, %162 : vector<2x1xf32>
    %165 = arith.mulf %160, %164 : vector<2x1xf32>
    %166 = vector.broadcast %3 : f32 to vector<2x1xf32>
    %167 = arith.addf %166, %165 : vector<2x1xf32>
    %168 = vector.broadcast %5 : f32 to vector<2x1xf32>
    %169 = arith.mulf %116, %168 : vector<2x1xf32>
    %170 = arith.addf %167, %169 : vector<2x1xf32>
    %171 = arith.mulf %145, %119 : vector<2x32xf32>
    %172 = arith.mulf %152, %155 : vector<2x32xf32>
    %173 = arith.addf %171, %172 : vector<2x32xf32>
    %174 = math.tanh %173 : vector<2x32xf32>
    %175 = vector.broadcast %16 : vector<1x32xf32> to vector<2x32xf32>
    %176 = arith.mulf %174, %175 : vector<2x32xf32>
    %cst_37 = arith.constant dense<0.000000e+00> : vector<2xf32>
    %177 = vector.multi_reduction <add>, %176, %cst_37 [1] : vector<2x32xf32> to vector<2xf32>
    %178 = vector.shape_cast %177 : vector<2xf32> to vector<2x1xf32>
    %cst_38 = arith.constant 1.000000e+00 : f32
    %179 = vector.broadcast %cst_38 : f32 to vector<2x1xf32>
    %180 = arith.addf %179, %178 : vector<2x1xf32>
    %181 = arith.mulf %170, %180 : vector<2x1xf32>
    %c3_i32 = arith.constant 3 : i32
    %182 = arith.index_cast %c3_i32 : i32 to index
    %c0_39 = arith.constant 0 : index
    %c0_40 = arith.constant 0 : index
    %183 = vector.load %arg2[%182, %c0_39, %c0_40] : memref<8x2x1xf32, #tpu.memory_space<vmem>>, vector<1x2x1xf32>
    %184 = vector.shape_cast %183 : vector<1x2x1xf32> to vector<2x1xf32>
    %185 = vector.shape_cast %184 : vector<2x1xf32> to vector<1x2x1xf32>
    %186 = vector.broadcast %185 : vector<1x2x1xf32> to vector<3x2x32xf32>
    %187 = arith.mulf %186, %9 : vector<3x2x32xf32>
    %188 = vector.shape_cast %181 : vector<2x1xf32> to vector<1x2x1xf32>
    %189 = vector.broadcast %188 : vector<1x2x1xf32> to vector<3x2x32xf32>
    %190 = arith.mulf %189, %12 : vector<3x2x32xf32>
    %191 = arith.addf %187, %190 : vector<3x2x32xf32>
    %192 = arith.addf %191, %15 : vector<3x2x32xf32>
    %193 = vector.extract_strided_slice %192 {offsets = [0, 0, 0], sizes = [1, 2, 32], strides = [1, 1, 1]} : vector<3x2x32xf32> to vector<1x2x32xf32>
    %194 = vector.shape_cast %193 : vector<1x2x32xf32> to vector<2x32xf32>
    %195 = arith.negf %194 : vector<2x32xf32>
    %196 = math.exp %195 : vector<2x32xf32>
    %cst_41 = arith.constant 1.000000e+00 : f32
    %197 = vector.broadcast %cst_41 : f32 to vector<2x32xf32>
    %198 = arith.addf %197, %196 : vector<2x32xf32>
    %199 = arith.divf %197, %198 : vector<2x32xf32>
    %200 = vector.extract_strided_slice %192 {offsets = [1, 0, 0], sizes = [1, 2, 32], strides = [1, 1, 1]} : vector<3x2x32xf32> to vector<1x2x32xf32>
    %201 = vector.shape_cast %200 : vector<1x2x32xf32> to vector<2x32xf32>
    %202 = arith.negf %201 : vector<2x32xf32>
    %203 = math.exp %202 : vector<2x32xf32>
    %cst_42 = arith.constant 1.000000e+00 : f32
    %204 = vector.broadcast %cst_42 : f32 to vector<2x32xf32>
    %205 = arith.addf %204, %203 : vector<2x32xf32>
    %206 = arith.divf %204, %205 : vector<2x32xf32>
    %207 = vector.extract_strided_slice %192 {offsets = [2, 0, 0], sizes = [1, 2, 32], strides = [1, 1, 1]} : vector<3x2x32xf32> to vector<1x2x32xf32>
    %208 = vector.shape_cast %207 : vector<1x2x32xf32> to vector<2x32xf32>
    %209 = math.tanh %208 : vector<2x32xf32>
    %cst_43 = arith.constant 0.000000e+00 : f32
    %210 = vector.broadcast %cst_43 : f32 to vector<2x1xf32>
    %211 = arith.cmpf olt, %184, %210 : vector<2x1xf32>
    %212 = arith.extui %211 : vector<2x1xi1> to vector<2x1xi32>
    %213 = arith.sitofp %212 : vector<2x1xi32> to vector<2x1xf32>
    %214 = arith.mulf %184, %184 : vector<2x1xf32>
    %215 = vector.broadcast %6 : f32 to vector<2x1xf32>
    %216 = arith.mulf %215, %213 : vector<2x1xf32>
    %217 = vector.broadcast %4 : f32 to vector<2x1xf32>
    %218 = arith.addf %217, %216 : vector<2x1xf32>
    %219 = arith.mulf %214, %218 : vector<2x1xf32>
    %220 = vector.broadcast %3 : f32 to vector<2x1xf32>
    %221 = arith.addf %220, %219 : vector<2x1xf32>
    %222 = vector.broadcast %5 : f32 to vector<2x1xf32>
    %223 = arith.mulf %170, %222 : vector<2x1xf32>
    %224 = arith.addf %221, %223 : vector<2x1xf32>
    %225 = arith.mulf %199, %173 : vector<2x32xf32>
    %226 = arith.mulf %206, %209 : vector<2x32xf32>
    %227 = arith.addf %225, %226 : vector<2x32xf32>
    %228 = math.tanh %227 : vector<2x32xf32>
    %229 = vector.broadcast %16 : vector<1x32xf32> to vector<2x32xf32>
    %230 = arith.mulf %228, %229 : vector<2x32xf32>
    %cst_44 = arith.constant dense<0.000000e+00> : vector<2xf32>
    %231 = vector.multi_reduction <add>, %230, %cst_44 [1] : vector<2x32xf32> to vector<2xf32>
    %232 = vector.shape_cast %231 : vector<2xf32> to vector<2x1xf32>
    %cst_45 = arith.constant 1.000000e+00 : f32
    %233 = vector.broadcast %cst_45 : f32 to vector<2x1xf32>
    %234 = arith.addf %233, %232 : vector<2x1xf32>
    %235 = arith.mulf %224, %234 : vector<2x1xf32>
    %c4_i32 = arith.constant 4 : i32
    %236 = arith.index_cast %c4_i32 : i32 to index
    %c0_46 = arith.constant 0 : index
    %c0_47 = arith.constant 0 : index
    %237 = vector.load %arg2[%236, %c0_46, %c0_47] : memref<8x2x1xf32, #tpu.memory_space<vmem>>, vector<1x2x1xf32>
    %238 = vector.shape_cast %237 : vector<1x2x1xf32> to vector<2x1xf32>
    %239 = vector.shape_cast %238 : vector<2x1xf32> to vector<1x2x1xf32>
    %240 = vector.broadcast %239 : vector<1x2x1xf32> to vector<3x2x32xf32>
    %241 = arith.mulf %240, %9 : vector<3x2x32xf32>
    %242 = vector.shape_cast %235 : vector<2x1xf32> to vector<1x2x1xf32>
    %243 = vector.broadcast %242 : vector<1x2x1xf32> to vector<3x2x32xf32>
    %244 = arith.mulf %243, %12 : vector<3x2x32xf32>
    %245 = arith.addf %241, %244 : vector<3x2x32xf32>
    %246 = arith.addf %245, %15 : vector<3x2x32xf32>
    %247 = vector.extract_strided_slice %246 {offsets = [0, 0, 0], sizes = [1, 2, 32], strides = [1, 1, 1]} : vector<3x2x32xf32> to vector<1x2x32xf32>
    %248 = vector.shape_cast %247 : vector<1x2x32xf32> to vector<2x32xf32>
    %249 = arith.negf %248 : vector<2x32xf32>
    %250 = math.exp %249 : vector<2x32xf32>
    %cst_48 = arith.constant 1.000000e+00 : f32
    %251 = vector.broadcast %cst_48 : f32 to vector<2x32xf32>
    %252 = arith.addf %251, %250 : vector<2x32xf32>
    %253 = arith.divf %251, %252 : vector<2x32xf32>
    %254 = vector.extract_strided_slice %246 {offsets = [1, 0, 0], sizes = [1, 2, 32], strides = [1, 1, 1]} : vector<3x2x32xf32> to vector<1x2x32xf32>
    %255 = vector.shape_cast %254 : vector<1x2x32xf32> to vector<2x32xf32>
    %256 = arith.negf %255 : vector<2x32xf32>
    %257 = math.exp %256 : vector<2x32xf32>
    %cst_49 = arith.constant 1.000000e+00 : f32
    %258 = vector.broadcast %cst_49 : f32 to vector<2x32xf32>
    %259 = arith.addf %258, %257 : vector<2x32xf32>
    %260 = arith.divf %258, %259 : vector<2x32xf32>
    %261 = vector.extract_strided_slice %246 {offsets = [2, 0, 0], sizes = [1, 2, 32], strides = [1, 1, 1]} : vector<3x2x32xf32> to vector<1x2x32xf32>
    %262 = vector.shape_cast %261 : vector<1x2x32xf32> to vector<2x32xf32>
    %263 = math.tanh %262 : vector<2x32xf32>
    %cst_50 = arith.constant 0.000000e+00 : f32
    %264 = vector.broadcast %cst_50 : f32 to vector<2x1xf32>
    %265 = arith.cmpf olt, %238, %264 : vector<2x1xf32>
    %266 = arith.extui %265 : vector<2x1xi1> to vector<2x1xi32>
    %267 = arith.sitofp %266 : vector<2x1xi32> to vector<2x1xf32>
    %268 = arith.mulf %238, %238 : vector<2x1xf32>
    %269 = vector.broadcast %6 : f32 to vector<2x1xf32>
    %270 = arith.mulf %269, %267 : vector<2x1xf32>
    %271 = vector.broadcast %4 : f32 to vector<2x1xf32>
    %272 = arith.addf %271, %270 : vector<2x1xf32>
    %273 = arith.mulf %268, %272 : vector<2x1xf32>
    %274 = vector.broadcast %3 : f32 to vector<2x1xf32>
    %275 = arith.addf %274, %273 : vector<2x1xf32>
    %276 = vector.broadcast %5 : f32 to vector<2x1xf32>
    %277 = arith.mulf %224, %276 : vector<2x1xf32>
    %278 = arith.addf %275, %277 : vector<2x1xf32>
    %279 = arith.mulf %253, %227 : vector<2x32xf32>
    %280 = arith.mulf %260, %263 : vector<2x32xf32>
    %281 = arith.addf %279, %280 : vector<2x32xf32>
    %282 = math.tanh %281 : vector<2x32xf32>
    %283 = vector.broadcast %16 : vector<1x32xf32> to vector<2x32xf32>
    %284 = arith.mulf %282, %283 : vector<2x32xf32>
    %cst_51 = arith.constant dense<0.000000e+00> : vector<2xf32>
    %285 = vector.multi_reduction <add>, %284, %cst_51 [1] : vector<2x32xf32> to vector<2xf32>
    %286 = vector.shape_cast %285 : vector<2xf32> to vector<2x1xf32>
    %cst_52 = arith.constant 1.000000e+00 : f32
    %287 = vector.broadcast %cst_52 : f32 to vector<2x1xf32>
    %288 = arith.addf %287, %286 : vector<2x1xf32>
    %289 = arith.mulf %278, %288 : vector<2x1xf32>
    %c5_i32 = arith.constant 5 : i32
    %290 = arith.index_cast %c5_i32 : i32 to index
    %c0_53 = arith.constant 0 : index
    %c0_54 = arith.constant 0 : index
    %291 = vector.load %arg2[%290, %c0_53, %c0_54] : memref<8x2x1xf32, #tpu.memory_space<vmem>>, vector<1x2x1xf32>
    %292 = vector.shape_cast %291 : vector<1x2x1xf32> to vector<2x1xf32>
    %293 = vector.shape_cast %292 : vector<2x1xf32> to vector<1x2x1xf32>
    %294 = vector.broadcast %293 : vector<1x2x1xf32> to vector<3x2x32xf32>
    %295 = arith.mulf %294, %9 : vector<3x2x32xf32>
    %296 = vector.shape_cast %289 : vector<2x1xf32> to vector<1x2x1xf32>
    %297 = vector.broadcast %296 : vector<1x2x1xf32> to vector<3x2x32xf32>
    %298 = arith.mulf %297, %12 : vector<3x2x32xf32>
    %299 = arith.addf %295, %298 : vector<3x2x32xf32>
    %300 = arith.addf %299, %15 : vector<3x2x32xf32>
    %301 = vector.extract_strided_slice %300 {offsets = [0, 0, 0], sizes = [1, 2, 32], strides = [1, 1, 1]} : vector<3x2x32xf32> to vector<1x2x32xf32>
    %302 = vector.shape_cast %301 : vector<1x2x32xf32> to vector<2x32xf32>
    %303 = arith.negf %302 : vector<2x32xf32>
    %304 = math.exp %303 : vector<2x32xf32>
    %cst_55 = arith.constant 1.000000e+00 : f32
    %305 = vector.broadcast %cst_55 : f32 to vector<2x32xf32>
    %306 = arith.addf %305, %304 : vector<2x32xf32>
    %307 = arith.divf %305, %306 : vector<2x32xf32>
    %308 = vector.extract_strided_slice %300 {offsets = [1, 0, 0], sizes = [1, 2, 32], strides = [1, 1, 1]} : vector<3x2x32xf32> to vector<1x2x32xf32>
    %309 = vector.shape_cast %308 : vector<1x2x32xf32> to vector<2x32xf32>
    %310 = arith.negf %309 : vector<2x32xf32>
    %311 = math.exp %310 : vector<2x32xf32>
    %cst_56 = arith.constant 1.000000e+00 : f32
    %312 = vector.broadcast %cst_56 : f32 to vector<2x32xf32>
    %313 = arith.addf %312, %311 : vector<2x32xf32>
    %314 = arith.divf %312, %313 : vector<2x32xf32>
    %315 = vector.extract_strided_slice %300 {offsets = [2, 0, 0], sizes = [1, 2, 32], strides = [1, 1, 1]} : vector<3x2x32xf32> to vector<1x2x32xf32>
    %316 = vector.shape_cast %315 : vector<1x2x32xf32> to vector<2x32xf32>
    %317 = math.tanh %316 : vector<2x32xf32>
    %cst_57 = arith.constant 0.000000e+00 : f32
    %318 = vector.broadcast %cst_57 : f32 to vector<2x1xf32>
    %319 = arith.cmpf olt, %292, %318 : vector<2x1xf32>
    %320 = arith.extui %319 : vector<2x1xi1> to vector<2x1xi32>
    %321 = arith.sitofp %320 : vector<2x1xi32> to vector<2x1xf32>
    %322 = arith.mulf %292, %292 : vector<2x1xf32>
    %323 = vector.broadcast %6 : f32 to vector<2x1xf32>
    %324 = arith.mulf %323, %321 : vector<2x1xf32>
    %325 = vector.broadcast %4 : f32 to vector<2x1xf32>
    %326 = arith.addf %325, %324 : vector<2x1xf32>
    %327 = arith.mulf %322, %326 : vector<2x1xf32>
    %328 = vector.broadcast %3 : f32 to vector<2x1xf32>
    %329 = arith.addf %328, %327 : vector<2x1xf32>
    %330 = vector.broadcast %5 : f32 to vector<2x1xf32>
    %331 = arith.mulf %278, %330 : vector<2x1xf32>
    %332 = arith.addf %329, %331 : vector<2x1xf32>
    %333 = arith.mulf %307, %281 : vector<2x32xf32>
    %334 = arith.mulf %314, %317 : vector<2x32xf32>
    %335 = arith.addf %333, %334 : vector<2x32xf32>
    %336 = math.tanh %335 : vector<2x32xf32>
    %337 = vector.broadcast %16 : vector<1x32xf32> to vector<2x32xf32>
    %338 = arith.mulf %336, %337 : vector<2x32xf32>
    %cst_58 = arith.constant dense<0.000000e+00> : vector<2xf32>
    %339 = vector.multi_reduction <add>, %338, %cst_58 [1] : vector<2x32xf32> to vector<2xf32>
    %340 = vector.shape_cast %339 : vector<2xf32> to vector<2x1xf32>
    %cst_59 = arith.constant 1.000000e+00 : f32
    %341 = vector.broadcast %cst_59 : f32 to vector<2x1xf32>
    %342 = arith.addf %341, %340 : vector<2x1xf32>
    %343 = arith.mulf %332, %342 : vector<2x1xf32>
    %c6_i32 = arith.constant 6 : i32
    %344 = arith.index_cast %c6_i32 : i32 to index
    %c0_60 = arith.constant 0 : index
    %c0_61 = arith.constant 0 : index
    %345 = vector.load %arg2[%344, %c0_60, %c0_61] : memref<8x2x1xf32, #tpu.memory_space<vmem>>, vector<1x2x1xf32>
    %346 = vector.shape_cast %345 : vector<1x2x1xf32> to vector<2x1xf32>
    %347 = vector.shape_cast %346 : vector<2x1xf32> to vector<1x2x1xf32>
    %348 = vector.broadcast %347 : vector<1x2x1xf32> to vector<3x2x32xf32>
    %349 = arith.mulf %348, %9 : vector<3x2x32xf32>
    %350 = vector.shape_cast %343 : vector<2x1xf32> to vector<1x2x1xf32>
    %351 = vector.broadcast %350 : vector<1x2x1xf32> to vector<3x2x32xf32>
    %352 = arith.mulf %351, %12 : vector<3x2x32xf32>
    %353 = arith.addf %349, %352 : vector<3x2x32xf32>
    %354 = arith.addf %353, %15 : vector<3x2x32xf32>
    %355 = vector.extract_strided_slice %354 {offsets = [0, 0, 0], sizes = [1, 2, 32], strides = [1, 1, 1]} : vector<3x2x32xf32> to vector<1x2x32xf32>
    %356 = vector.shape_cast %355 : vector<1x2x32xf32> to vector<2x32xf32>
    %357 = arith.negf %356 : vector<2x32xf32>
    %358 = math.exp %357 : vector<2x32xf32>
    %cst_62 = arith.constant 1.000000e+00 : f32
    %359 = vector.broadcast %cst_62 : f32 to vector<2x32xf32>
    %360 = arith.addf %359, %358 : vector<2x32xf32>
    %361 = arith.divf %359, %360 : vector<2x32xf32>
    %362 = vector.extract_strided_slice %354 {offsets = [1, 0, 0], sizes = [1, 2, 32], strides = [1, 1, 1]} : vector<3x2x32xf32> to vector<1x2x32xf32>
    %363 = vector.shape_cast %362 : vector<1x2x32xf32> to vector<2x32xf32>
    %364 = arith.negf %363 : vector<2x32xf32>
    %365 = math.exp %364 : vector<2x32xf32>
    %cst_63 = arith.constant 1.000000e+00 : f32
    %366 = vector.broadcast %cst_63 : f32 to vector<2x32xf32>
    %367 = arith.addf %366, %365 : vector<2x32xf32>
    %368 = arith.divf %366, %367 : vector<2x32xf32>
    %369 = vector.extract_strided_slice %354 {offsets = [2, 0, 0], sizes = [1, 2, 32], strides = [1, 1, 1]} : vector<3x2x32xf32> to vector<1x2x32xf32>
    %370 = vector.shape_cast %369 : vector<1x2x32xf32> to vector<2x32xf32>
    %371 = math.tanh %370 : vector<2x32xf32>
    %cst_64 = arith.constant 0.000000e+00 : f32
    %372 = vector.broadcast %cst_64 : f32 to vector<2x1xf32>
    %373 = arith.cmpf olt, %346, %372 : vector<2x1xf32>
    %374 = arith.extui %373 : vector<2x1xi1> to vector<2x1xi32>
    %375 = arith.sitofp %374 : vector<2x1xi32> to vector<2x1xf32>
    %376 = arith.mulf %346, %346 : vector<2x1xf32>
    %377 = vector.broadcast %6 : f32 to vector<2x1xf32>
    %378 = arith.mulf %377, %375 : vector<2x1xf32>
    %379 = vector.broadcast %4 : f32 to vector<2x1xf32>
    %380 = arith.addf %379, %378 : vector<2x1xf32>
    %381 = arith.mulf %376, %380 : vector<2x1xf32>
    %382 = vector.broadcast %3 : f32 to vector<2x1xf32>
    %383 = arith.addf %382, %381 : vector<2x1xf32>
    %384 = vector.broadcast %5 : f32 to vector<2x1xf32>
    %385 = arith.mulf %332, %384 : vector<2x1xf32>
    %386 = arith.addf %383, %385 : vector<2x1xf32>
    %387 = arith.mulf %361, %335 : vector<2x32xf32>
    %388 = arith.mulf %368, %371 : vector<2x32xf32>
    %389 = arith.addf %387, %388 : vector<2x32xf32>
    %390 = math.tanh %389 : vector<2x32xf32>
    %391 = vector.broadcast %16 : vector<1x32xf32> to vector<2x32xf32>
    %392 = arith.mulf %390, %391 : vector<2x32xf32>
    %cst_65 = arith.constant dense<0.000000e+00> : vector<2xf32>
    %393 = vector.multi_reduction <add>, %392, %cst_65 [1] : vector<2x32xf32> to vector<2xf32>
    %394 = vector.shape_cast %393 : vector<2xf32> to vector<2x1xf32>
    %cst_66 = arith.constant 1.000000e+00 : f32
    %395 = vector.broadcast %cst_66 : f32 to vector<2x1xf32>
    %396 = arith.addf %395, %394 : vector<2x1xf32>
    %397 = arith.mulf %386, %396 : vector<2x1xf32>
    %c7_i32 = arith.constant 7 : i32
    %398 = arith.index_cast %c7_i32 : i32 to index
    %c0_67 = arith.constant 0 : index
    %c0_68 = arith.constant 0 : index
    %399 = vector.load %arg2[%398, %c0_67, %c0_68] : memref<8x2x1xf32, #tpu.memory_space<vmem>>, vector<1x2x1xf32>
    %400 = vector.shape_cast %399 : vector<1x2x1xf32> to vector<2x1xf32>
    %401 = vector.shape_cast %400 : vector<2x1xf32> to vector<1x2x1xf32>
    %402 = vector.broadcast %401 : vector<1x2x1xf32> to vector<3x2x32xf32>
    %403 = arith.mulf %402, %9 : vector<3x2x32xf32>
    %404 = vector.shape_cast %397 : vector<2x1xf32> to vector<1x2x1xf32>
    %405 = vector.broadcast %404 : vector<1x2x1xf32> to vector<3x2x32xf32>
    %406 = arith.mulf %405, %12 : vector<3x2x32xf32>
    %407 = arith.addf %403, %406 : vector<3x2x32xf32>
    %408 = arith.addf %407, %15 : vector<3x2x32xf32>
    %409 = vector.extract_strided_slice %408 {offsets = [0, 0, 0], sizes = [1, 2, 32], strides = [1, 1, 1]} : vector<3x2x32xf32> to vector<1x2x32xf32>
    %410 = vector.shape_cast %409 : vector<1x2x32xf32> to vector<2x32xf32>
    %411 = arith.negf %410 : vector<2x32xf32>
    %412 = math.exp %411 : vector<2x32xf32>
    %cst_69 = arith.constant 1.000000e+00 : f32
    %413 = vector.broadcast %cst_69 : f32 to vector<2x32xf32>
    %414 = arith.addf %413, %412 : vector<2x32xf32>
    %415 = arith.divf %413, %414 : vector<2x32xf32>
    %416 = vector.extract_strided_slice %408 {offsets = [1, 0, 0], sizes = [1, 2, 32], strides = [1, 1, 1]} : vector<3x2x32xf32> to vector<1x2x32xf32>
    %417 = vector.shape_cast %416 : vector<1x2x32xf32> to vector<2x32xf32>
    %418 = arith.negf %417 : vector<2x32xf32>
    %419 = math.exp %418 : vector<2x32xf32>
    %cst_70 = arith.constant 1.000000e+00 : f32
    %420 = vector.broadcast %cst_70 : f32 to vector<2x32xf32>
    %421 = arith.addf %420, %419 : vector<2x32xf32>
    %422 = arith.divf %420, %421 : vector<2x32xf32>
    %423 = vector.extract_strided_slice %408 {offsets = [2, 0, 0], sizes = [1, 2, 32], strides = [1, 1, 1]} : vector<3x2x32xf32> to vector<1x2x32xf32>
    %424 = vector.shape_cast %423 : vector<1x2x32xf32> to vector<2x32xf32>
    %425 = math.tanh %424 : vector<2x32xf32>
    %cst_71 = arith.constant 0.000000e+00 : f32
    %426 = vector.broadcast %cst_71 : f32 to vector<2x1xf32>
    %427 = arith.cmpf olt, %400, %426 : vector<2x1xf32>
    %428 = arith.extui %427 : vector<2x1xi1> to vector<2x1xi32>
    %429 = arith.sitofp %428 : vector<2x1xi32> to vector<2x1xf32>
    %430 = arith.mulf %400, %400 : vector<2x1xf32>
    %431 = vector.broadcast %6 : f32 to vector<2x1xf32>
    %432 = arith.mulf %431, %429 : vector<2x1xf32>
    %433 = vector.broadcast %4 : f32 to vector<2x1xf32>
    %434 = arith.addf %433, %432 : vector<2x1xf32>
    %435 = arith.mulf %430, %434 : vector<2x1xf32>
    %436 = vector.broadcast %3 : f32 to vector<2x1xf32>
    %437 = arith.addf %436, %435 : vector<2x1xf32>
    %438 = vector.broadcast %5 : f32 to vector<2x1xf32>
    %439 = arith.mulf %386, %438 : vector<2x1xf32>
    %440 = arith.addf %437, %439 : vector<2x1xf32>
    %441 = arith.mulf %415, %389 : vector<2x32xf32>
    %442 = arith.mulf %422, %425 : vector<2x32xf32>
    %443 = arith.addf %441, %442 : vector<2x32xf32>
    %444 = math.tanh %443 : vector<2x32xf32>
    %445 = vector.broadcast %16 : vector<1x32xf32> to vector<2x32xf32>
    %446 = arith.mulf %444, %445 : vector<2x32xf32>
    %cst_72 = arith.constant dense<0.000000e+00> : vector<2xf32>
    %447 = vector.multi_reduction <add>, %446, %cst_72 [1] : vector<2x32xf32> to vector<2xf32>
    %448 = vector.shape_cast %447 : vector<2xf32> to vector<2x1xf32>
    %cst_73 = arith.constant 1.000000e+00 : f32
    %449 = vector.broadcast %cst_73 : f32 to vector<2x1xf32>
    %450 = arith.addf %449, %448 : vector<2x1xf32>
    %451 = arith.mulf %440, %450 : vector<2x1xf32>
    %c8_i32 = arith.constant 8 : i32
    %c0_74 = arith.constant 0 : index
    %c0_75 = arith.constant 0 : index
    %452 = vector.load %arg8[%c0_74, %c0_75] : memref<2x1xf32, #tpu.memory_space<vmem>>, vector<2x1xf32>
    tpu.vector_store %arg8[%c0_74, %c0_75], %440 {strides = array<i32>} : memref<2x1xf32, #tpu.memory_space<vmem>>, vector<2x1xf32>,
    %c0_76 = arith.constant 0 : index
    %c0_77 = arith.constant 0 : index
    %453 = vector.load %arg9[%c0_76, %c0_77] : memref<2x1xf32, #tpu.memory_space<vmem>>, vector<2x1xf32>
    tpu.vector_store %arg9[%c0_76, %c0_77], %451 {strides = array<i32>} : memref<2x1xf32, #tpu.memory_space<vmem>>, vector<2x1xf32>,
    %c0_78 = arith.constant 0 : index
    %c0_79 = arith.constant 0 : index
    %454 = vector.load %arg10[%c0_78, %c0_79] : memref<2x32xf32, #tpu.memory_space<vmem>>, vector<2x32xf32>
    tpu.vector_store %arg10[%c0_78, %c0_79], %443 {strides = array<i32>} : memref<2x32xf32, #tpu.memory_space<vmem>>, vector<2x32xf32>,
    %c0_i32_80 = arith.constant 0 : i32
    %455 = arith.cmpi eq, %arg0, %c0_i32_80 : i32
    %456 = arith.extui %455 : i1 to i32
    %c0_i32_81 = arith.constant 0 : i32
    %457 = arith.cmpi ne, %456, %c0_i32_81 : i32
    scf.if %457 {
      %c0_82 = arith.constant 0 : index
      %c0_83 = arith.constant 0 : index
      %458 = vector.load %arg7[%c0_82, %c0_83] : memref<2x1xf32, #tpu.memory_space<vmem>>, vector<2x1xf32>
      tpu.vector_store %arg7[%c0_82, %c0_83], %451 {strides = array<i32>} : memref<2x1xf32, #tpu.memory_space<vmem>>, vector<2x1xf32>,
    } else {
    }
    return
  }
  func.func @transform_0(%arg0: i32) -> i32 {
    %c0_i32 = arith.constant 0 : i32
    %c0_i32_0 = arith.constant 0 : i32
    return %c0_i32 : i32
  }
  func.func @transform_1(%arg0: i32) -> (i32, i32, i32) {
    %c0_i32 = arith.constant 0 : i32
    %c0_i32_0 = arith.constant 0 : i32
    %c0_i32_1 = arith.constant 0 : i32
    return %arg0, %c0_i32, %c0_i32_0 : i32, i32, i32
  }
  func.func @transform_2(%arg0: i32) -> (i32, i32, i32) {
    %c0_i32 = arith.constant 0 : i32
    %c0_i32_0 = arith.constant 0 : i32
    %c0_i32_1 = arith.constant 0 : i32
    %c0_i32_2 = arith.constant 0 : i32
    return %c0_i32, %c0_i32_0, %c0_i32_1 : i32, i32, i32
  }
  func.func @transform_3(%arg0: i32) -> (i32, i32, i32) {
    %c0_i32 = arith.constant 0 : i32
    %c0_i32_0 = arith.constant 0 : i32
    %c0_i32_1 = arith.constant 0 : i32
    %c0_i32_2 = arith.constant 0 : i32
    return %c0_i32, %c0_i32_0, %c0_i32_1 : i32, i32, i32
  }
  func.func @transform_4(%arg0: i32) -> (i32, i32, i32) {
    %c0_i32 = arith.constant 0 : i32
    %c0_i32_0 = arith.constant 0 : i32
    %c0_i32_1 = arith.constant 0 : i32
    %c0_i32_2 = arith.constant 0 : i32
    return %c0_i32, %c0_i32_0, %c0_i32_1 : i32, i32, i32
  }
  func.func @transform_5(%arg0: i32) -> (i32, i32) {
    %c0_i32 = arith.constant 0 : i32
    %c0_i32_0 = arith.constant 0 : i32
    %c0_i32_1 = arith.constant 0 : i32
    return %c0_i32, %c0_i32_0 : i32, i32
  }
  func.func @transform_6(%arg0: i32) -> (i32, i32) {
    %c0_i32 = arith.constant 0 : i32
    %c0_i32_0 = arith.constant 0 : i32
    %c0_i32_1 = arith.constant 0 : i32
    return %c0_i32, %c0_i32_0 : i32, i32
  }
}

</mosaic_0001>

<llo_original>
// kernel: tpu_custom_call.1
$region0: #{tpu_custom_call.1}
  #allocation0 [shape = 'u32[]', space=smem, size = 0x4, offset = 0x4, fixed_abs, tag = 'smem constant byte address 0x4 - core index']
  #allocation1 [shape = 'u32[144,128]{1,0:T(1,128)}', space=vmem, size = 0x12000, scoped, tag = 'internal scratch']
  #allocation2 [shape = 'f32[2,1]{1,0:T(2,128)}', space=vmem, size = 0x400, scoped, tag = 'scratch operand']
  #allocation3 [shape = 'f32[2,1]{1,0:T(2,128)}', space=vmem, size = 0x400, scoped, tag = 'scratch operand']
  #allocation4 [shape = 'f32[2,32]{1,0:T(2,128)}', space=vmem, size = 0x400, scoped, tag = 'scratch operand']
  %s0 = inlined_call_operand.vmem [shape: f32[4], index: 0, kind: input, shape index: {}]
  %s1 = inlined_call_operand.vmem [shape: f32[8,2,1], index: 1, kind: input, shape index: {}]
  %s2 = inlined_call_operand.vmem [shape: f32[3,1,32], index: 2, kind: input, shape index: {}]
  %s3 = inlined_call_operand.vmem [shape: f32[3,1,32], index: 3, kind: input, shape index: {}]
  %s4 = inlined_call_operand.vmem [shape: f32[3,1,32], index: 4, kind: input, shape index: {}]
  %s5 = inlined_call_operand.vmem [shape: f32[1,32], index: 5, kind: input, shape index: {}]
  %s6 = inlined_call_operand.vmem [shape: f32[2,1], index: 6, kind: output, shape index: {}]
  %s7 = sld [smem:[#allocation0]]
  $region46: #{tpu_custom_call.1} parent=0
    _
  %s9 = ssub.s32 1, %s7
  %s10 = scalar_select 0, %s9, %s7
  $region1: #{tpu_custom_call.1} parent=0
    #allocation5 [shape = 'u8[512]{0}', space=smem, size = 0x200, scoped, tag = 'input window, operand 0, single buffered']
    #allocation6 [shape = 's32[1]{0}', space=sflag, size = 0x4, scoped, tag = 'scoped memory for tpu_custom_call.1']
    %11 = vsyncpa [#allocation6], 0
    // Predicated region
    $region2: #{tpu_custom_call.1} parent=1 // pred_check
      _
    $region3: #{tpu_custom_call.1} parent=1 // pred_check_branch
      %13 = sbr.rel (0) target = $region5
    $region4: #{tpu_custom_call.1} parent=1 // pred_region
      %s15 = ssub.s32 16, 16
      %16 = vsyncadd [#allocation6], %s15
      %s18 = sshll.u32 %s0, 4
      %s19 = int_to_ptr.vmem [resolvable:$true] %s18
      %21 = dma.vmem_to_smem %s19, 16, [#allocation5], [#allocation6]
    $region5: #{tpu_custom_call.1} parent=1 // pred_fallthru
      _
    // Predicated region
    $region6: #{tpu_custom_call.1} parent=1 // pred_check
      _
    $region7: #{tpu_custom_call.1} parent=1 // pred_check_branch
      %23 = sbr.rel (0) target = $region9
    $region8: #{tpu_custom_call.1} parent=1 // pred_region
      _
    $region9: #{tpu_custom_call.1} parent=1 // pred_fallthru
      _
    // Predicated region
    $region10: #{tpu_custom_call.1} parent=1 // pred_check
      _
    $region11: #{tpu_custom_call.1} parent=1 // pred_check_branch
      %25 = sbr.rel (0) target = $region13
    $region12: #{tpu_custom_call.1} parent=1 // pred_region
      _
    $region13: #{tpu_custom_call.1} parent=1 // pred_fallthru
      _
    // Predicated region
    $region14: #{tpu_custom_call.1} parent=1 // pred_check
      _
    $region15: #{tpu_custom_call.1} parent=1 // pred_check_branch
      %27 = sbr.rel (0) target = $region17
    $region16: #{tpu_custom_call.1} parent=1 // pred_region
      _
    $region17: #{tpu_custom_call.1} parent=1 // pred_fallthru
      _
    // Predicated region
    $region18: #{tpu_custom_call.1} parent=1 // pred_check
      _
    $region19: #{tpu_custom_call.1} parent=1 // pred_check_branch
      %29 = sbr.rel (0) target = $region21
    $region20: #{tpu_custom_call.1} parent=1 // pred_region
      _
    $region21: #{tpu_custom_call.1} parent=1 // pred_fallthru
      _
    // Predicated region
    $region22: #{tpu_custom_call.1} parent=1 // pred_check
      _
    $region23: #{tpu_custom_call.1} parent=1 // pred_check_branch
      %31 = sbr.rel (0) target = $region25
    $region24: #{tpu_custom_call.1} parent=1 // pred_region
      _
    $region25: #{tpu_custom_call.1} parent=1 // pred_fallthru
      _
    // Predicated region
    $region26: #{tpu_custom_call.1} parent=1 // pred_check
      _
    $region27: #{tpu_custom_call.1} parent=1 // pred_check_branch
      %33 = sbr.rel (0) target = $region29
    $region28: #{tpu_custom_call.1} parent=1 // pred_region
      %34 = dma.done [#allocation6], 16
    $region29: #{tpu_custom_call.1} parent=1 // pred_fallthru
      _
    %35 = sfence
    %p36 = scmp.eq.s32.totalorder 0, 0
    // Predicated region
    $region30: #{tpu_custom_call.1} parent=1 // pred_check
      %p37 = pneg %p36
    $region31: #{tpu_custom_call.1} parent=1 // pred_check_branch
      %39 = sbr.rel (%p37) target = $region33
    $region32: #{tpu_custom_call.1} parent=1 // pred_region
      %vm40 = vcmask 1024
      %41 = vst.msk [vmem:[#allocation2] sm:$0x3] %vm40, 0.0
      %42 = vst.msk [vmem:[#allocation3] sm:$0x3] %vm40, 0.0
      %vm43 = vcmask 254976
      %44 = vst.msk [vmem:[#allocation4] sm:$0x3] %vm43, 0.0
    $region33: #{tpu_custom_call.1} parent=1 // pred_fallthru
      _
    %s45 = sld [smem:[#allocation5]]
    %s46 = sld [smem:[#allocation5 + $0x1]]
    %s47 = sld [smem:[#allocation5 + $0x2]]
    %s48 = sld [smem:[#allocation5 + $0x3]]
    %v49 = vld [vmem:[%s2] sm:$0x1]
    %v50 = vld [vmem:[%s2 + $0x1] sm:$0x1]
    %v51 = vld [vmem:[%s2 + $0x2] sm:$0x1]
    %v55 = vlaneseq
    %v56 = vshrl.u32 %v55, 7
    %v57 = vsub.s32 0, %v56
    %v58 = vrot.slane %v49, %v57
    %v59 = vlaneseq
    %v60 = vshrl.u32 %v59, 7
    %v61 = vsub.s32 0, %v60
    %v62 = vrot.slane %v50, %v61
    %v63 = vlaneseq
    %v64 = vshrl.u32 %v63, 7
    %v65 = vsub.s32 0, %v64
    %v66 = vrot.slane %v51, %v65
    %v70 = vld [vmem:[%s3] sm:$0x1]
    %v71 = vld [vmem:[%s3 + $0x1] sm:$0x1]
    %v72 = vld [vmem:[%s3 + $0x2] sm:$0x1]
    %v76 = vlaneseq
    %v77 = vshrl.u32 %v76, 7
    %v78 = vsub.s32 0, %v77
    %v79 = vrot.slane %v70, %v78
    %v80 = vlaneseq
    %v81 = vshrl.u32 %v80, 7
    %v82 = vsub.s32 0, %v81
    %v83 = vrot.slane %v71, %v82
    %v84 = vlaneseq
    %v85 = vshrl.u32 %v84, 7
    %v86 = vsub.s32 0, %v85
    %v87 = vrot.slane %v72, %v86
    %v91 = vld [vmem:[%s4] sm:$0x1]
    %v92 = vld [vmem:[%s4 + $0x1] sm:$0x1]
    %v93 = vld [vmem:[%s4 + $0x2] sm:$0x1]
    %v97 = vlaneseq
    %v98 = vshrl.u32 %v97, 7
    %v99 = vsub.s32 0, %v98
    %v100 = vrot.slane %v91, %v99
    %v101 = vlaneseq
    %v102 = vshrl.u32 %v101, 7
    %v103 = vsub.s32 0, %v102
    %v104 = vrot.slane %v92, %v103
    %v105 = vlaneseq
    %v106 = vshrl.u32 %v105, 7
    %v107 = vsub.s32 0, %v106
    %v108 = vrot.slane %v93, %v107
    %v112 = vld [vmem:[%s5] sm:$0x1]
    %v113 = vld [vmem:[#allocation2] sm:$0x3]
    %v114 = vld [vmem:[#allocation3] sm:$0x3]
    %v115 = vld [vmem:[#allocation4] sm:$0x3]
    %v116 = vld [vmem:[%s1] sm:$0x3]
    %118 = vset.pattern.permute.xlu0 0
    %119 = vperm.xlu0 %118, %v116
    %v120 = vpop.permute.xlu0 %119
    %v122 = vmul.f32 %v120, %v58
    %v123 = vmul.f32 %v120, %v62
    %v124 = vmul.f32 %v120, %v66
    %126 = vset.pattern.permute.xlu0 0
    %127 = vperm.xlu0 %126, %v114
    %v128 = vpop.permute.xlu0 %127
    %v130 = vmul.f32 %v128, %v79
    %v131 = vmul.f32 %v128, %v83
    %v132 = vmul.f32 %v128, %v87
    %v133 = vadd.f32 %v122, %v130
    %v134 = vadd.f32 %v123, %v131
    %v135 = vadd.f32 %v124, %v132
    %v136 = vadd.f32 %v133, %v100
    %v137 = vadd.f32 %v134, %v104
    %v138 = vadd.f32 %v135, %v108
    %v139 = vxor.u32 %v136, 2147483648
    %v140 = vmul.f32 %v139, 1.442695
    %v141 = vpow.pop %v140
    %v142 = vadd.f32 %v141, 1.0
    %v143 = vrcp.pop %v142
    %v144 = vmul.f32 1.0, %v143
    %v145 = vxor.u32 %v137, 2147483648
    %v146 = vmul.f32 %v145, 1.442695
    %v147 = vpow.pop %v146
    %v148 = vadd.f32 %v147, 1.0
    %v149 = vrcp.pop %v148
    %v150 = vmul.f32 1.0, %v149
    %v151 = vtanh.pop %v138
    %vm152 = vcmp.lt.f32.partialorder %v116, 0.0
    %v153 = vsel %vm152, 1, 0
    %v154 = vcvt.s32.f32 %v153
    %v155 = vmul.f32 %v116, %v116
    %v156 = vstv %s48
    %v157 = vmul.f32 %v156, %v154
    %v158 = vstv %s46
    %v159 = vadd.f32 %v158, %v157
    %v160 = vmul.f32 %v155, %v159
    %v161 = vstv %s45
    %v162 = vadd.f32 %v161, %v160
    %v163 = vstv %s47
    %v164 = vmul.f32 %v113, %v163
    %v165 = vadd.f32 %v162, %v164
    %v166 = vmul.f32 %v144, %v115
    %v167 = vmul.f32 %v150, %v151
    %v168 = vadd.f32 %v166, %v167
    %v169 = vtanh.pop %v168
    %v171 = vlaneseq
    %v172 = vshrl.u32 %v171, 7
    %v173 = vsub.s32 0, %v172
    %v174 = vrot.slane %v112, %v173
    %v176 = vmul.f32 %v169, %v174
    %vm177 = vcmask 254976
    %v178 = vsel %vm177, %v176, 0.0
    %179 = vadd.xlane.f32.xlu0 %v178
    %v180 = vpop.xlane.xlu0 %179
    %v181 = vadd.f32 %v180, 1.0
    %v182 = vmul.f32 %v165, %v181
    %s183 = scalar_lea.vmem %s1, 2
    %v184 = vld [vmem:[%s183] sm:$0x3]
    %186 = vset.pattern.permute.xlu0 0
    %187 = vperm.xlu0 %186, %v184
    %v188 = vpop.permute.xlu0 %187
    %v190 = vmul.f32 %v188, %v58
    %v191 = vmul.f32 %v188, %v62
    %v192 = vmul.f32 %v188, %v66
    %194 = vset.pattern.permute.xlu0 0
    %195 = vperm.xlu0 %194, %v182
    %v196 = vpop.permute.xlu0 %195
    %v198 = vmul.f32 %v196, %v79
    %v199 = vmul.f32 %v196, %v83
    %v200 = vmul.f32 %v196, %v87
    %v201 = vadd.f32 %v190, %v198
    %v202 = vadd.f32 %v191, %v199
    %v203 = vadd.f32 %v192, %v200
    %v204 = vadd.f32 %v201, %v100
    %v205 = vadd.f32 %v202, %v104
    %v206 = vadd.f32 %v203, %v108
    %v207 = vxor.u32 %v204, 2147483648
    %v208 = vmul.f32 %v207, 1.442695
    %v209 = vpow.pop %v208
    %v210 = vadd.f32 %v209, 1.0
    %v211 = vrcp.pop %v210
    %v212 = vmul.f32 1.0, %v211
    %v213 = vxor.u32 %v205, 2147483648
    %v214 = vmul.f32 %v213, 1.442695
    %v215 = vpow.pop %v214
    %v216 = vadd.f32 %v215, 1.0
    %v217 = vrcp.pop %v216
    %v218 = vmul.f32 1.0, %v217
    %v219 = vtanh.pop %v206
    %vm220 = vcmp.lt.f32.partialorder %v184, 0.0
    %v221 = vsel %vm220, 1, 0
    %v222 = vcvt.s32.f32 %v221
    %v223 = vmul.f32 %v184, %v184
    %v224 = vmul.f32 %v156, %v222
    %v225 = vadd.f32 %v158, %v224
    %v226 = vmul.f32 %v223, %v225
    %v227 = vadd.f32 %v161, %v226
    %v228 = vmul.f32 %v165, %v163
    %v229 = vadd.f32 %v227, %v228
    %v230 = vmul.f32 %v212, %v168
    %v231 = vmul.f32 %v218, %v219
    %v232 = vadd.f32 %v230, %v231
    %v233 = vtanh.pop %v232
    %v234 = vmul.f32 %v233, %v174
    %v235 = vsel %vm177, %v234, 0.0
    %236 = vadd.xlane.f32.xlu0 %v235
    %v237 = vpop.xlane.xlu0 %236
    %v238 = vadd.f32 %v237, 1.0
    %v239 = vmul.f32 %v229, %v238
    %s240 = scalar_lea.vmem %s1, 4
    %v241 = vld [vmem:[%s240] sm:$0x3]
    %243 = vset.pattern.permute.xlu0 0
    %244 = vperm.xlu0 %243, %v241
    %v245 = vpop.permute.xlu0 %244
    %v247 = vmul.f32 %v245, %v58
    %v248 = vmul.f32 %v245, %v62
    %v249 = vmul.f32 %v245, %v66
    %251 = vset.pattern.permute.xlu0 0
    %252 = vperm.xlu0 %251, %v239
    %v253 = vpop.permute.xlu0 %252
    %v255 = vmul.f32 %v253, %v79
    %v256 = vmul.f32 %v253, %v83
    %v257 = vmul.f32 %v253, %v87
    %v258 = vadd.f32 %v247, %v255
    %v259 = vadd.f32 %v248, %v256
    %v260 = vadd.f32 %v249, %v257
    %v261 = vadd.f32 %v258, %v100
    %v262 = vadd.f32 %v259, %v104
    %v263 = vadd.f32 %v260, %v108
    %v264 = vxor.u32 %v261, 2147483648
    %v265 = vmul.f32 %v264, 1.442695
    %v266 = vpow.pop %v265
    %v267 = vadd.f32 %v266, 1.0
    %v268 = vrcp.pop %v267
    %v269 = vmul.f32 1.0, %v268
    %v270 = vxor.u32 %v262, 2147483648
    %v271 = vmul.f32 %v270, 1.442695
    %v272 = vpow.pop %v271
    %v273 = vadd.f32 %v272, 1.0
    %v274 = vrcp.pop %v273
    %v275 = vmul.f32 1.0, %v274
    %v276 = vtanh.pop %v263
    %vm277 = vcmp.lt.f32.partialorder %v241, 0.0
    %v278 = vsel %vm277, 1, 0
    %v279 = vcvt.s32.f32 %v278
    %v280 = vmul.f32 %v241, %v241
    %v281 = vmul.f32 %v156, %v279
    %v282 = vadd.f32 %v158, %v281
    %v283 = vmul.f32 %v280, %v282
    %v284 = vadd.f32 %v161, %v283
    %v285 = vmul.f32 %v229, %v163
    %v286 = vadd.f32 %v284, %v285
    %v287 = vmul.f32 %v269, %v232
    %v288 = vmul.f32 %v275, %v276
    %v289 = vadd.f32 %v287, %v288
    %v290 = vtanh.pop %v289
    %v291 = vmul.f32 %v290, %v174
    %v292 = vsel %vm177, %v291, 0.0
    %293 = vadd.xlane.f32.xlu0 %v292
    %v294 = vpop.xlane.xlu0 %293
    %v295 = vadd.f32 %v294, 1.0
    %v296 = vmul.f32 %v286, %v295
    %s297 = scalar_lea.vmem %s1, 6
    %v298 = vld [vmem:[%s297] sm:$0x3]
    %300 = vset.pattern.permute.xlu0 0
    %301 = vperm.xlu0 %300, %v298
    %v302 = vpop.permute.xlu0 %301
    %v304 = vmul.f32 %v302, %v58
    %v305 = vmul.f32 %v302, %v62
    %v306 = vmul.f32 %v302, %v66
    %308 = vset.pattern.permute.xlu0 0
    %309 = vperm.xlu0 %308, %v296
    %v310 = vpop.permute.xlu0 %309
    %v312 = vmul.f32 %v310, %v79
    %v313 = vmul.f32 %v310, %v83
    %v314 = vmul.f32 %v310, %v87
    %v315 = vadd.f32 %v304, %v312
    %v316 = vadd.f32 %v305, %v313
    %v317 = vadd.f32 %v306, %v314
    %v318 = vadd.f32 %v315, %v100
    %v319 = vadd.f32 %v316, %v104
    %v320 = vadd.f32 %v317, %v108
    %v321 = vxor.u32 %v318, 2147483648
    %v322 = vmul.f32 %v321, 1.442695
    %v323 = vpow.pop %v322
    %v324 = vadd.f32 %v323, 1.0
    %v325 = vrcp.pop %v324
    %v326 = vmul.f32 1.0, %v325
    %v327 = vxor.u32 %v319, 2147483648
    %v328 = vmul.f32 %v327, 1.442695
    %v329 = vpow.pop %v328
    %v330 = vadd.f32 %v329, 1.0
    %v331 = vrcp.pop %v330
    %v332 = vmul.f32 1.0, %v331
    %v333 = vtanh.pop %v320
    %vm334 = vcmp.lt.f32.partialorder %v298, 0.0
    %v335 = vsel %vm334, 1, 0
    %v336 = vcvt.s32.f32 %v335
    %v337 = vmul.f32 %v298, %v298
    %v338 = vmul.f32 %v156, %v336
    %v339 = vadd.f32 %v158, %v338
    %v340 = vmul.f32 %v337, %v339
    %v341 = vadd.f32 %v161, %v340
    %v342 = vmul.f32 %v286, %v163
    %v343 = vadd.f32 %v341, %v342
    %v344 = vmul.f32 %v326, %v289
    %v345 = vmul.f32 %v332, %v333
    %v346 = vadd.f32 %v344, %v345
    %v347 = vtanh.pop %v346
    %v348 = vmul.f32 %v347, %v174
    %v349 = vsel %vm177, %v348, 0.0
    %350 = vadd.xlane.f32.xlu0 %v349
    %v351 = vpop.xlane.xlu0 %350
    %v352 = vadd.f32 %v351, 1.0
    %v353 = vmul.f32 %v343, %v352
    %s354 = scalar_lea.vmem %s1, 8
    %v355 = vld [vmem:[%s354] sm:$0x3]
    %357 = vset.pattern.permute.xlu0 0
    %358 = vperm.xlu0 %357, %v355
    %v359 = vpop.permute.xlu0 %358
    %v361 = vmul.f32 %v359, %v58
    %v362 = vmul.f32 %v359, %v62
    %v363 = vmul.f32 %v359, %v66
    %365 = vset.pattern.permute.xlu0 0
    %366 = vperm.xlu0 %365, %v353
    %v367 = vpop.permute.xlu0 %366
    %v369 = vmul.f32 %v367, %v79
    %v370 = vmul.f32 %v367, %v83
    %v371 = vmul.f32 %v367, %v87
    %v372 = vadd.f32 %v361, %v369
    %v373 = vadd.f32 %v362, %v370
    %v374 = vadd.f32 %v363, %v371
    %v375 = vadd.f32 %v372, %v100
    %v376 = vadd.f32 %v373, %v104
    %v377 = vadd.f32 %v374, %v108
    %v378 = vxor.u32 %v375, 2147483648
    %v379 = vmul.f32 %v378, 1.442695
    %v380 = vpow.pop %v379
    %v381 = vadd.f32 %v380, 1.0
    %v382 = vrcp.pop %v381
    %v383 = vmul.f32 1.0, %v382
    %v384 = vxor.u32 %v376, 2147483648
    %v385 = vmul.f32 %v384, 1.442695
    %v386 = vpow.pop %v385
    %v387 = vadd.f32 %v386, 1.0
    %v388 = vrcp.pop %v387
    %v389 = vmul.f32 1.0, %v388
    %v390 = vtanh.pop %v377
    %vm391 = vcmp.lt.f32.partialorder %v355, 0.0
    %v392 = vsel %vm391, 1, 0
    %v393 = vcvt.s32.f32 %v392
    %v394 = vmul.f32 %v355, %v355
    %v395 = vmul.f32 %v156, %v393
    %v396 = vadd.f32 %v158, %v395
    %v397 = vmul.f32 %v394, %v396
    %v398 = vadd.f32 %v161, %v397
    %v399 = vmul.f32 %v343, %v163
    %v400 = vadd.f32 %v398, %v399
    %v401 = vmul.f32 %v383, %v346
    %v402 = vmul.f32 %v389, %v390
    %v403 = vadd.f32 %v401, %v402
    %v404 = vtanh.pop %v403
    %v405 = vmul.f32 %v404, %v174
    %v406 = vsel %vm177, %v405, 0.0
    %407 = vadd.xlane.f32.xlu0 %v406
    %v408 = vpop.xlane.xlu0 %407
    %v409 = vadd.f32 %v408, 1.0
    %v410 = vmul.f32 %v400, %v409
    %s411 = scalar_lea.vmem %s1, 10
    %v412 = vld [vmem:[%s411] sm:$0x3]
    %414 = vset.pattern.permute.xlu0 0
    %415 = vperm.xlu0 %414, %v412
    %v416 = vpop.permute.xlu0 %415
    %v418 = vmul.f32 %v416, %v58
    %v419 = vmul.f32 %v416, %v62
    %v420 = vmul.f32 %v416, %v66
    %422 = vset.pattern.permute.xlu0 0
    %423 = vperm.xlu0 %422, %v410
    %v424 = vpop.permute.xlu0 %423
    %v426 = vmul.f32 %v424, %v79
    %v427 = vmul.f32 %v424, %v83
    %v428 = vmul.f32 %v424, %v87
    %v429 = vadd.f32 %v418, %v426
    %v430 = vadd.f32 %v419, %v427
    %v431 = vadd.f32 %v420, %v428
    %v432 = vadd.f32 %v429, %v100
    %v433 = vadd.f32 %v430, %v104
    %v434 = vadd.f32 %v431, %v108
    %v435 = vxor.u32 %v432, 2147483648
    %v436 = vmul.f32 %v435, 1.442695
    %v437 = vpow.pop %v436
    %v438 = vadd.f32 %v437, 1.0
    %v439 = vrcp.pop %v438
    %v440 = vmul.f32 1.0, %v439
    %v441 = vxor.u32 %v433, 2147483648
    %v442 = vmul.f32 %v441, 1.442695
    %v443 = vpow.pop %v442
    %v444 = vadd.f32 %v443, 1.0
    %v445 = vrcp.pop %v444
    %v446 = vmul.f32 1.0, %v445
    %v447 = vtanh.pop %v434
    %vm448 = vcmp.lt.f32.partialorder %v412, 0.0
    %v449 = vsel %vm448, 1, 0
    %v450 = vcvt.s32.f32 %v449
    %v451 = vmul.f32 %v412, %v412
    %v452 = vmul.f32 %v156, %v450
    %v453 = vadd.f32 %v158, %v452
    %v454 = vmul.f32 %v451, %v453
    %v455 = vadd.f32 %v161, %v454
    %v456 = vmul.f32 %v400, %v163
    %v457 = vadd.f32 %v455, %v456
    %v458 = vmul.f32 %v440, %v403
    %v459 = vmul.f32 %v446, %v447
    %v460 = vadd.f32 %v458, %v459
    %v461 = vtanh.pop %v460
    %v462 = vmul.f32 %v461, %v174
    %v463 = vsel %vm177, %v462, 0.0
    %464 = vadd.xlane.f32.xlu0 %v463
    %v465 = vpop.xlane.xlu0 %464
    %v466 = vadd.f32 %v465, 1.0
    %v467 = vmul.f32 %v457, %v466
    %s468 = scalar_lea.vmem %s1, 12
    %v469 = vld [vmem:[%s468] sm:$0x3]
    %471 = vset.pattern.permute.xlu0 0
    %472 = vperm.xlu0 %471, %v469
    %v473 = vpop.permute.xlu0 %472
    %v475 = vmul.f32 %v473, %v58
    %v476 = vmul.f32 %v473, %v62
    %v477 = vmul.f32 %v473, %v66
    %479 = vset.pattern.permute.xlu0 0
    %480 = vperm.xlu0 %479, %v467
    %v481 = vpop.permute.xlu0 %480
    %v483 = vmul.f32 %v481, %v79
    %v484 = vmul.f32 %v481, %v83
    %v485 = vmul.f32 %v481, %v87
    %v486 = vadd.f32 %v475, %v483
    %v487 = vadd.f32 %v476, %v484
    %v488 = vadd.f32 %v477, %v485
    %v489 = vadd.f32 %v486, %v100
    %v490 = vadd.f32 %v487, %v104
    %v491 = vadd.f32 %v488, %v108
    %v492 = vxor.u32 %v489, 2147483648
    %v493 = vmul.f32 %v492, 1.442695
    %v494 = vpow.pop %v493
    %v495 = vadd.f32 %v494, 1.0
    %v496 = vrcp.pop %v495
    %v497 = vmul.f32 1.0, %v496
    %v498 = vxor.u32 %v490, 2147483648
    %v499 = vmul.f32 %v498, 1.442695
    %v500 = vpow.pop %v499
    %v501 = vadd.f32 %v500, 1.0
    %v502 = vrcp.pop %v501
    %v503 = vmul.f32 1.0, %v502
    %v504 = vtanh.pop %v491
    %vm505 = vcmp.lt.f32.partialorder %v469, 0.0
    %v506 = vsel %vm505, 1, 0
    %v507 = vcvt.s32.f32 %v506
    %v508 = vmul.f32 %v469, %v469
    %v509 = vmul.f32 %v156, %v507
    %v510 = vadd.f32 %v158, %v509
    %v511 = vmul.f32 %v508, %v510
    %v512 = vadd.f32 %v161, %v511
    %v513 = vmul.f32 %v457, %v163
    %v514 = vadd.f32 %v512, %v513
    %v515 = vmul.f32 %v497, %v460
    %v516 = vmul.f32 %v503, %v504
    %v517 = vadd.f32 %v515, %v516
    %v518 = vtanh.pop %v517
    %v519 = vmul.f32 %v518, %v174
    %v520 = vsel %vm177, %v519, 0.0
    %521 = vadd.xlane.f32.xlu0 %v520
    %v522 = vpop.xlane.xlu0 %521
    %v523 = vadd.f32 %v522, 1.0
    %v524 = vmul.f32 %v514, %v523
    %s525 = scalar_lea.vmem %s1, 14
    %v526 = vld [vmem:[%s525] sm:$0x3]
    %528 = vset.pattern.permute.xlu0 0
    %529 = vperm.xlu0 %528, %v526
    %v530 = vpop.permute.xlu0 %529
    %v532 = vmul.f32 %v530, %v58
    %v533 = vmul.f32 %v530, %v62
    %v534 = vmul.f32 %v530, %v66
    %536 = vset.pattern.permute.xlu0 0
    %537 = vperm.xlu0 %536, %v524
    %v538 = vpop.permute.xlu0 %537
    %v540 = vmul.f32 %v538, %v79
    %v541 = vmul.f32 %v538, %v83
    %v542 = vmul.f32 %v538, %v87
    %v543 = vadd.f32 %v532, %v540
    %v544 = vadd.f32 %v533, %v541
    %v545 = vadd.f32 %v534, %v542
    %v546 = vadd.f32 %v543, %v100
    %v547 = vadd.f32 %v544, %v104
    %v548 = vadd.f32 %v545, %v108
    %v549 = vxor.u32 %v546, 2147483648
    %v550 = vmul.f32 %v549, 1.442695
    %v551 = vpow.pop %v550
    %v552 = vadd.f32 %v551, 1.0
    %v553 = vrcp.pop %v552
    %v554 = vmul.f32 1.0, %v553
    %v555 = vxor.u32 %v547, 2147483648
    %v556 = vmul.f32 %v555, 1.442695
    %v557 = vpow.pop %v556
    %v558 = vadd.f32 %v557, 1.0
    %v559 = vrcp.pop %v558
    %v560 = vmul.f32 1.0, %v559
    %v561 = vtanh.pop %v548
    %vm562 = vcmp.lt.f32.partialorder %v526, 0.0
    %v563 = vsel %vm562, 1, 0
    %v564 = vcvt.s32.f32 %v563
    %v565 = vmul.f32 %v526, %v526
    %v566 = vmul.f32 %v156, %v564
    %v567 = vadd.f32 %v158, %v566
    %v568 = vmul.f32 %v565, %v567
    %v569 = vadd.f32 %v161, %v568
    %v570 = vmul.f32 %v514, %v163
    %v571 = vadd.f32 %v569, %v570
    %v572 = vmul.f32 %v554, %v517
    %v573 = vmul.f32 %v560, %v561
    %v574 = vadd.f32 %v572, %v573
    %v575 = vtanh.pop %v574
    %v576 = vmul.f32 %v575, %v174
    %v577 = vsel %vm177, %v576, 0.0
    %578 = vadd.xlane.f32.xlu0 %v577
    %v579 = vpop.xlane.xlu0 %578
    %v580 = vadd.f32 %v579, 1.0
    %v581 = vmul.f32 %v571, %v580
    %vm582 = vcmask 1024
    %583 = vst.msk [vmem:[#allocation2] sm:$0x3] %vm582, %v571
    %584 = vst.msk [vmem:[#allocation3] sm:$0x3] %vm582, %v581
    %585 = vst.msk [vmem:[#allocation4] sm:$0x3] %vm177, %v574
    // Predicated region
    $region34: #{tpu_custom_call.1} parent=1 // pred_check
      %p586 = pneg %p36
    $region35: #{tpu_custom_call.1} parent=1 // pred_check_branch
      %588 = sbr.rel (%p586) target = $region37
    $region36: #{tpu_custom_call.1} parent=1 // pred_region
      %589 = vst.msk [vmem:[%s6] sm:$0x3] %vm582, %v581
    $region37: #{tpu_custom_call.1} parent=1 // pred_fallthru
      _
    // Predicated region
    $region38: #{tpu_custom_call.1} parent=1 // pred_check
      _
    $region39: #{tpu_custom_call.1} parent=1 // pred_check_branch
      %591 = sbr.rel (0) target = $region41
    $region40: #{tpu_custom_call.1} parent=1 // pred_region
      _
    $region41: #{tpu_custom_call.1} parent=1 // pred_fallthru
      _
    // Predicated region
    $region42: #{tpu_custom_call.1} parent=1 // pred_check
      _
    $region43: #{tpu_custom_call.1} parent=1 // pred_check_branch
      %593 = sbr.rel (0) target = $region45
    $region44: #{tpu_custom_call.1} parent=1 // pred_region
      _
    $region45: #{tpu_custom_call.1} parent=1 // pred_fallthru
      _
    %594 = vsyncpa [#allocation6], 1

</llo_original>
